<compile_context>
chip_gen: v7x
topology: tpu7x:2x2x1
jax: 0.10.0
libtpu: 0.0.40
codegen_flags: <defaults>
</compile_context>

<pallas_src>
import math
import functools

import jax
import jax.numpy as jnp
from jax import lax
from jax.experimental import pallas as pl
from jax.experimental.pallas import tpu as pltpu


# --------------------------------------------------------------------------
# Helpers
# --------------------------------------------------------------------------

def _sublane_align(*dtypes):
    """Sublane alignment for a block: 8 for f32, 16 for bf16, 32 for int8."""
    a = 8
    for d in dtypes:
        bits = jnp.dtype(d).itemsize * 8
        a = max(a, 8 * max(1, 32 // bits))
    return a


def _pick_tile(dim, target, align):
    """Largest tile <= target that divides `dim` and is a multiple of `align`.
    Falls back to the full dimension (always legal for BlockSpec)."""
    if dim <= target:
        return dim
    t = (target // align) * align
    while t >= align:
        if dim % t == 0:
            return t
        t -= align
    return dim


def _default_vmem_limit():
    """Explicit scoped-VMEM budget: ~75% of physical (96 MiB on v5e/v6e, 48 MiB on v7x)."""
    try:
        cap = pltpu.get_tpu_info().vmem_capacity_bytes
        return min(100 * 1024 * 1024, int(cap * 3 // 4))
    except Exception:
        return 64 * 1024 * 1024


# --------------------------------------------------------------------------
# Tiled linear kernel:  out = X @ W + b
# --------------------------------------------------------------------------

def _linear_kernel(x_ref, w_ref, b_ref, o_ref, acc_ref, *, compute_dtype):
    k = pl.program_id(2)

    @pl.when(k == 0)
    def _():
        acc_ref[...] = jnp.zeros_like(acc_ref)

    x = x_ref[...]
    if x.dtype != compute_dtype:
        x = x.astype(compute_dtype)
    w = w_ref[...]
    if w.dtype != compute_dtype:
        w = w.astype(compute_dtype)
    acc_ref[...] += jnp.dot(x, w, preferred_element_type=jnp.float32)

    @pl.when(k == pl.num_programs(2) - 1)
    def _():
        # Bias is added exactly once, at finalize.
        o_ref[...] = (acc_ref[...] + b_ref[...]).astype(o_ref.dtype)


def pallas_linear(x, w, b, *, out_dtype=None, tm=512, tn=512, tk=512,
                  compute_dtype=jnp.bfloat16, vmem_limit_bytes=None):
    """x: [M, K], w: [K, N] (bf16), b: [N] -> [M, N] with f32 accumulation."""
    M, K = x.shape
    _, N = w.shape
    out_dtype = out_dtype or x.dtype
    tm = _pick_tile(M, tm, _sublane_align(x.dtype, out_dtype))  # sublane dim of X / out
    tn = _pick_tile(N, tn, 128)                                 # lane dim of W / out
    tk = _pick_tile(K, tk, 128)                                 # lane of X, sublane of W
    grid = (M // tm, N // tn, K // tk)

    kernel = functools.partial(_linear_kernel, compute_dtype=compute_dtype)
    return pl.pallas_call(
        kernel,
        out_shape=jax.ShapeDtypeStruct((M, N), out_dtype),
        grid_spec=pltpu.PrefetchScalarGridSpec(
            num_scalar_prefetch=0,
            grid=grid,
            in_specs=[
                pl.BlockSpec((tm, tk), lambda i, j, k: (i, k)),
                pl.BlockSpec((tk, tn), lambda i, j, k: (k, j)),
                pl.BlockSpec((1, tn), lambda i, j, k: (0, j)),
            ],
            out_specs=pl.BlockSpec((tm, tn), lambda i, j, k: (i, j)),
            scratch_shapes=[pltpu.VMEM((tm, tn), jnp.float32)],
        ),
        compiler_params=pltpu.CompilerParams(
            dimension_semantics=("parallel", "parallel", "arbitrary"),
            vmem_limit_bytes=vmem_limit_bytes,
        ),
    )(x, w, b.reshape(1, N))


# --------------------------------------------------------------------------
# Fused QKV projection: one matmul over [Wq|Wk|Wv], three separate outputs
# (avoids wrapper-level HBM slice copies of the fused qkv slab).
# --------------------------------------------------------------------------

def _fused_qkv_kernel(x_ref, w_ref, b_ref, q_ref, k_ref, v_ref, acc_ref, *,
                      n, compute_dtype):
    kstep = pl.program_id(1)

    @pl.when(kstep == 0)
    def _():
        acc_ref[...] = jnp.zeros_like(acc_ref)

    x = x_ref[...]
    if x.dtype != compute_dtype:
        x = x.astype(compute_dtype)
    acc_ref[...] += jnp.dot(x, w_ref[...], preferred_element_type=jnp.float32)

    @pl.when(kstep == pl.num_programs(1) - 1)
    def _():
        o = acc_ref[...] + b_ref[...]
        q_ref[...] = o[:, :n].astype(q_ref.dtype)
        k_ref[...] = o[:, n:2 * n].astype(k_ref.dtype)
        v_ref[...] = o[:, 2 * n:].astype(v_ref.dtype)


def pallas_fused_qkv(x, w_qkv, b_qkv, *, n, out_dtype=jnp.bfloat16,
                     compute_dtype=jnp.bfloat16, tm=512, tk=512,
                     vmem_limit_bytes=None):
    """x: [M, K], w_qkv: [K, 3n] -> (q, k, v) each [M, n] in out_dtype."""
    M, K = x.shape
    N3 = w_qkv.shape[1]
    assert N3 == 3 * n
    tm = _pick_tile(M, tm, _sublane_align(x.dtype, out_dtype))
    tk = _pick_tile(K, tk, 128)
    grid = (M // tm, K // tk)

    kernel = functools.partial(_fused_qkv_kernel, n=n, compute_dtype=compute_dtype)
    return pl.pallas_call(
        kernel,
        out_shape=(
            jax.ShapeDtypeStruct((M, n), out_dtype),
            jax.ShapeDtypeStruct((M, n), out_dtype),
            jax.ShapeDtypeStruct((M, n), out_dtype),
        ),
        grid_spec=pltpu.PrefetchScalarGridSpec(
            num_scalar_prefetch=0,
            grid=grid,
            in_specs=[
                pl.BlockSpec((tm, tk), lambda i, k: (i, k)),
                pl.BlockSpec((tk, N3), lambda i, k: (k, 0)),
                pl.BlockSpec((1, N3), lambda i, k: (0, 0)),
            ],
            out_specs=(
                pl.BlockSpec((tm, n), lambda i, k: (i, 0)),
                pl.BlockSpec((tm, n), lambda i, k: (i, 0)),
                pl.BlockSpec((tm, n), lambda i, k: (i, 0)),
            ),
            scratch_shapes=[pltpu.VMEM((tm, N3), jnp.float32)],
        ),
        compiler_params=pltpu.CompilerParams(
            dimension_semantics=("parallel", "arbitrary"),
            vmem_limit_bytes=vmem_limit_bytes,
        ),
    )(x, w_qkv, b_qkv.reshape(1, N3))


# --------------------------------------------------------------------------
# Attention kernels (q/k/v in head-concat layout [B, seq, H*E], already scaled
# by 1/sqrt(d_k) via the folded Wq).
# --------------------------------------------------------------------------

def _attn_full_kernel(q_ref, k_ref, v_ref, o_ref, a_ref, *,
                      n_heads, d_k, d_v, compute_dtype, exp_dtype):
    # q_ref: (1, tl, H*dk), k_ref: (1, S, H*dk), v_ref: (1, S, H*dv)
    q = q_ref[0]
    k = k_ref[0]
    v = v_ref[0]
    out_heads = []
    for h in range(n_heads):
        qh = q[:, h * d_k:(h + 1) * d_k]
        kh = k[:, h * d_k:(h + 1) * d_k]
        vh = v[:, h * d_v:(h + 1) * d_v]
        if qh.dtype != compute_dtype:
            qh = qh.astype(compute_dtype)
        if kh.dtype != compute_dtype:
            kh = kh.astype(compute_dtype)
        if vh.dtype != compute_dtype:
            vh = vh.astype(compute_dtype)
        # Contract on last axes directly (no in-kernel transpose of K).
        s = lax.dot_general(qh, kh, (((1,), (1,)), ((), ())),
                            preferred_element_type=jnp.float32)        # (tl, S)
        m = jnp.max(s, axis=-1, keepdims=True)
        e = jnp.exp((s - m).astype(exp_dtype))
        e32 = e.astype(jnp.float32)
        denom = jnp.sum(e32, axis=-1, keepdims=True)
        inv = 1.0 / denom                    # exact: returned probs sum to 1
        a_ref[0, h] = (e32 * inv).astype(a_ref.dtype)
        oh = lax.dot_general(e.astype(compute_dtype), vh, (((1,), (0,)), ((), ())),
                             preferred_element_type=jnp.float32) * inv  # (tl, dv)
        out_heads.append(oh)
    # One lane-dense store for the whole (tl, H*dv) block.
    o_ref[0] = jnp.concatenate(out_heads, axis=-1).astype(o_ref.dtype)


def pallas_attention_full(q, k, v, *, n_heads, d_k, d_v,
                          compute_dtype=jnp.bfloat16, attn_dtype=jnp.bfloat16,
                          exp_dtype=jnp.bfloat16, l_block=128,
                          vmem_limit_bytes=None):
    """q: [B,L,H*dk], k: [B,S,H*dk], v: [B,S,H*dv] -> (out [B,L,H*dv], attn [B,H,L,S])."""
    B, L, _ = q.shape
    S = k.shape[1]
    tl = _pick_tile(L, l_block, _sublane_align(q.dtype, attn_dtype))

    kernel = functools.partial(_attn_full_kernel, n_heads=n_heads, d_k=d_k,
                               d_v=d_v, compute_dtype=compute_dtype,
                               exp_dtype=exp_dtype)

    # The K/V blocks are invariant across the (inner) l grid axis, so when they are
    # large, single-buffering them (pl.Buffered(1)) halves their VMEM footprint at
    # zero re-DMA cost (matters on v7x's 64 MiB VMEM).
    kv_bytes = S * n_heads * (d_k + d_v) * jnp.dtype(k.dtype).itemsize
    budget = vmem_limit_bytes or (32 * 1024 * 1024)
    want_single_buffer_kv = kv_bytes > budget // 8

    def build_and_call(single_buffer_kv):
        kv_kwargs = dict(pipeline_mode=pl.Buffered(1)) if single_buffer_kv else {}
        in_specs = [
            pl.BlockSpec((1, tl, n_heads * d_k), lambda b, l: (b, l, 0)),
            pl.BlockSpec((1, S, n_heads * d_k), lambda b, l: (b, 0, 0), **kv_kwargs),
            pl.BlockSpec((1, S, n_heads * d_v), lambda b, l: (b, 0, 0), **kv_kwargs),
        ]
        return pl.pallas_call(
            kernel,
            out_shape=(
                jax.ShapeDtypeStruct((B, L, n_heads * d_v), q.dtype),
                jax.ShapeDtypeStruct((B, n_heads, L, S), attn_dtype),
            ),
            grid_spec=pltpu.PrefetchScalarGridSpec(
                num_scalar_prefetch=0,
                grid=(B, L // tl),
                in_specs=in_specs,
                out_specs=(
                    pl.BlockSpec((1, tl, n_heads * d_v), lambda b, l: (b, l, 0)),
                    pl.BlockSpec((1, n_heads, tl, S), lambda b, l: (b, 0, l, 0)),
                ),
            ),
            compiler_params=pltpu.CompilerParams(
                dimension_semantics=("parallel", "parallel"),
                vmem_limit_bytes=vmem_limit_bytes,
            ),
        )(q, k, v)

    if want_single_buffer_kv:
        try:
            return build_and_call(True)
        except Exception:
            pass
    return build_and_call(False)


def _attn_flash_kernel(q_ref, k_ref, v_ref, o_ref, m_sc, l_sc, acc_sc, *,
                       n_heads, d_k, d_v, compute_dtype, exp_dtype):
    kv = pl.program_id(2)

    @pl.when(kv == 0)
    def _():
        m_sc[...] = jnp.full(m_sc.shape, -jnp.inf, dtype=m_sc.dtype)
        l_sc[...] = jnp.zeros(l_sc.shape, dtype=l_sc.dtype)
        acc_sc[...] = jnp.zeros(acc_sc.shape, dtype=acc_sc.dtype)

    q = q_ref[0]   # (tl, H*dk)
    k = k_ref[0]   # (ts, H*dk)
    v = v_ref[0]   # (ts, H*dv)
    for h in range(n_heads):
        qh = q[:, h * d_k:(h + 1) * d_k]
        kh = k[:, h * d_k:(h + 1) * d_k]
        vh = v[:, h * d_v:(h + 1) * d_v]
        if qh.dtype != compute_dtype:
            qh = qh.astype(compute_dtype)
        if kh.dtype != compute_dtype:
            kh = kh.astype(compute_dtype)
        if vh.dtype != compute_dtype:
            vh = vh.astype(compute_dtype)
        s = lax.dot_general(qh, kh, (((1,), (1,)), ((), ())),
                            preferred_element_type=jnp.float32)        # (tl, ts)
        m_prev = m_sc[h]
        m_new = jnp.maximum(m_prev, jnp.max(s, axis=-1, keepdims=True))
        alpha = jnp.exp(m_prev - m_new)                                 # f32 state
        p = jnp.exp((s - m_new).astype(exp_dtype))                      # bf16 exp on v6e/v7x
        l_sc[h] = alpha * l_sc[h] + jnp.sum(p.astype(jnp.float32), axis=-1,
                                            keepdims=True)
        acc_sc[h] = alpha * acc_sc[h] + lax.dot_general(
            p.astype(compute_dtype), vh, (((1,), (0,)), ((), ())),
            preferred_element_type=jnp.float32)
        m_sc[h] = m_new

    @pl.when(kv == pl.num_programs(2) - 1)
    def _():
        out_heads = [acc_sc[h] * pl.reciprocal(l_sc[h], approx=True)
                     for h in range(n_heads)]
        o_ref[0] = jnp.concatenate(out_heads, axis=-1).astype(o_ref.dtype)


def pallas_attention_flash(q, k, v, *, n_heads, d_k, d_v,
                           compute_dtype=jnp.bfloat16, exp_dtype=jnp.bfloat16,
                           l_block=256, kv_block=512, vmem_limit_bytes=None):
    """Flash-style (online softmax) attention; no attention-probabilities output."""
    B, L, _ = q.shape
    S = k.shape[1]
    align = _sublane_align(q.dtype)
    tl = _pick_tile(L, l_block, align)
    ts = _pick_tile(S, kv_block, align)

    kernel = functools.partial(_attn_flash_kernel, n_heads=n_heads, d_k=d_k,
                               d_v=d_v, compute_dtype=compute_dtype,
                               exp_dtype=exp_dtype)
    return pl.pallas_call(
        kernel,
        out_shape=jax.ShapeDtypeStruct((B, L, n_heads * d_v), q.dtype),
        grid_spec=pltpu.PrefetchScalarGridSpec(
            num_scalar_prefetch=0,
            grid=(B, L // tl, S // ts),
            in_specs=[
                pl.BlockSpec((1, tl, n_heads * d_k), lambda b, l, s: (b, l, 0)),
                pl.BlockSpec((1, ts, n_heads * d_k), lambda b, l, s: (b, s, 0)),
                pl.BlockSpec((1, ts, n_heads * d_v), lambda b, l, s: (b, s, 0)),
            ],
            out_specs=pl.BlockSpec((1, tl, n_heads * d_v), lambda b, l, s: (b, l, 0)),
            scratch_shapes=[
                pltpu.VMEM((n_heads, tl, 1), jnp.float32),      # running max m
                pltpu.VMEM((n_heads, tl, 1), jnp.float32),      # running sum l
                pltpu.VMEM((n_heads, tl, d_v), jnp.float32),    # running acc
            ],
        ),
        compiler_params=pltpu.CompilerParams(
            dimension_semantics=("parallel", "parallel", "arbitrary"),
            vmem_limit_bytes=vmem_limit_bytes,
        ),
    )(q, k, v)


# --------------------------------------------------------------------------
# Parameter init (torch-equivalent, f32) + one-time kernel-param preparation
# --------------------------------------------------------------------------

def init_attention_layer_params(key, d_model, n_heads, d_keys=None, d_values=None,
                                dtype=jnp.float32):
    d_keys = d_keys or d_model // n_heads
    d_values = d_values or d_model // n_heads
    ks = jax.random.split(key, 8)

    def lin(kw, kb, fan_in, fan_out):
        # torch nn.Linear default: U(-1/sqrt(fan_in), 1/sqrt(fan_in))
        bound = 1.0 / math.sqrt(fan_in)
        w = jax.random.uniform(kw, (fan_in, fan_out), dtype, -bound, bound)
        b = jax.random.uniform(kb, (fan_out,), dtype, -bound, bound)
        return w, b

    Wq, bq = lin(ks[0], ks[1], d_model, d_keys * n_heads)
    Wk, bk = lin(ks[2], ks[3], d_model, d_keys * n_heads)
    Wv, bv = lin(ks[4], ks[5], d_model, d_values * n_heads)
    Wo, bo = lin(ks[6], ks[7], d_values * n_heads, d_model)
    return dict(Wq=Wq, bq=bq, Wk=Wk, bk=bk, Wv=Wv, bv=bv, Wo=Wo, bo=bo,
                n_heads=n_heads, d_keys=d_keys, d_values=d_values)


def prepare_kernel_params(params, *, param_dtype=jnp.bfloat16):
    """One-time: cast weights to bf16, fold 1/sqrt(d_k) into Wq/bq, concat Wqkv."""
    H, dk, dv = params["n_heads"], params["d_keys"], params["d_values"]
    scale = 1.0 / math.sqrt(dk)
    Wq = (params["Wq"] * scale).astype(param_dtype)
    bq = (params["bq"] * scale).astype(param_dtype)
    Wk = params["Wk"].astype(param_dtype)
    bk = params["bk"].astype(param_dtype)
    Wv = params["Wv"].astype(param_dtype)
    bv = params["bv"].astype(param_dtype)
    kp = dict(Wq=Wq, bq=bq, Wk=Wk, bk=bk, Wv=Wv, bv=bv,
              Wo=params["Wo"].astype(param_dtype),
              bo=params["bo"].astype(param_dtype),
              n_heads=H, d_keys=dk, d_values=dv)
    if dk == dv:
        kp["Wqkv"] = jnp.concatenate([Wq, Wk, Wv], axis=1)
        kp["bqkv"] = jnp.concatenate([bq, bk, bv], axis=0)
    return kp


# --------------------------------------------------------------------------
# AttentionLayer forward (projections + inner attention + out projection)
# --------------------------------------------------------------------------

def attention_layer_forward(kparams, queries, keys, values, attn_mask=None,
                            tau=None, delta=None, *, output_attention=True,
                            compute_dtype=jnp.bfloat16, attn_dtype=jnp.bfloat16,
                            exp_dtype=jnp.bfloat16, l_block=128, kv_block=512,
                            vmem_limit_bytes=None):
    # TODO(synk): attn_mask / tau / delta (masked & de-stationary attention extras)
    # are not implemented; this reproduces FullAttention(mask_flag=False, dropout=0).
    if attn_mask is not None or tau is not None or delta is not None:
        raise NotImplementedError("attn_mask / tau / delta are not supported")
    if vmem_limit_bytes is None:
        vmem_limit_bytes = _default_vmem_limit()

    B, L, Dm = queries.shape
    _, S, _ = keys.shape
    H, dk, dv = kparams["n_heads"], kparams["d_keys"], kparams["d_values"]

    if queries is keys and keys is values and "Wqkv" in kparams:
        # Self-attention: one matmul over [Wq|Wk|Wv] (reads activations once),
        # writing three separate lane-dense bf16 outputs (no HBM slice copies).
        qf, kf, vf = pallas_fused_qkv(
            queries.reshape(B * L, Dm), kparams["Wqkv"], kparams["bqkv"],
            n=H * dk, out_dtype=compute_dtype, compute_dtype=compute_dtype,
            vmem_limit_bytes=vmem_limit_bytes)
        q = qf.reshape(B, L, H * dk)
        k = kf.reshape(B, S, H * dk)
        v = vf.reshape(B, S, H * dv)
    else:
        q = pallas_linear(queries.reshape(B * L, Dm), kparams["Wq"], kparams["bq"],
                          out_dtype=compute_dtype, compute_dtype=compute_dtype,
                          vmem_limit_bytes=vmem_limit_bytes).reshape(B, L, H * dk)
        k = pallas_linear(keys.reshape(B * S, Dm), kparams["Wk"], kparams["bk"],
                          out_dtype=compute_dtype, compute_dtype=compute_dtype,
                          vmem_limit_bytes=vmem_limit_bytes).reshape(B, S, H * dk)
        v = pallas_linear(values.reshape(B * S, Dm), kparams["Wv"], kparams["bv"],
                          out_dtype=compute_dtype, compute_dtype=compute_dtype,
                          vmem_limit_bytes=vmem_limit_bytes).reshape(B, S, H * dv)

    # q/k/v stay in head-concat (B, seq, H*E) layout: no HBM transposes, and the
    # attention output feeds the out-projection directly.
    if output_attention:
        out_heads, attn = pallas_attention_full(
            q, k, v, n_heads=H, d_k=dk, d_v=dv,
            compute_dtype=compute_dtype, attn_dtype=attn_dtype,
            exp_dtype=exp_dtype, l_block=l_block,
            vmem_limit_bytes=vmem_limit_bytes)
    else:
        out_heads = pallas_attention_flash(
            q, k, v, n_heads=H, d_k=dk, d_v=dv,
            compute_dtype=compute_dtype, exp_dtype=exp_dtype,
            l_block=max(l_block, 256), kv_block=kv_block,
            vmem_limit_bytes=vmem_limit_bytes)
        attn = None

    out = pallas_linear(out_heads.reshape(B * L, H * dv), kparams["Wo"], kparams["bo"],
                        out_dtype=queries.dtype, compute_dtype=compute_dtype,
                        vmem_limit_bytes=vmem_limit_bytes)
    return out.reshape(B, L, Dm), attn


# --------------------------------------------------------------------------
# Pure-JAX reference (uses the raw f32 parameters) for sanity checks
# --------------------------------------------------------------------------

def reference_forward(params, queries, keys, values):
    B, L, _ = queries.shape
    _, S, _ = keys.shape
    H, dk, dv = params["n_heads"], params["d_keys"], params["d_values"]
    q = (queries @ params["Wq"] + params["bq"]).reshape(B, L, H, dk)
    k = (keys @ params["Wk"] + params["bk"]).reshape(B, S, H, dk)
    v = (values @ params["Wv"] + params["bv"]).reshape(B, S, H, dv)
    scale = 1.0 / math.sqrt(dk)
    scores = jnp.einsum("blhe,bshe->bhls", q, k) * scale
    attn = jax.nn.softmax(scores, axis=-1)
    out = jnp.einsum("bhls,bshd->blhd", attn, v).reshape(B, L, H * dv)
    out = out @ params["Wo"] + params["bo"]
    return out, attn


if __name__ == "__main__":
    d_model, n_heads = 32, 4
    key = jax.random.PRNGKey(0)
    kp_, kq, kk, kv, kx = jax.random.split(key, 5)
    params = init_attention_layer_params(kp_, d_model, n_heads)
    kparams = prepare_kernel_params(params)   # one-time bf16 cast + scale fold + Wqkv concat

    # ---- Test 1: cross-attention (distinct q/k/v), attention weights returned ----
    B, L, S = 2, 8, 16
    queries = jax.random.normal(kq, (B, L, d_model), jnp.float32)
    keys = jax.random.normal(kk, (B, S, d_model), jnp.float32)
    values = jax.random.normal(kv, (B, S, d_model), jnp.float32)

    out, attn = attention_layer_forward(kparams, queries, keys, values,
                                        attn_mask=None, output_attention=True)
    jax.block_until_ready(out)
    jax.block_until_ready(attn)

    ref_out, ref_attn = reference_forward(params, queries, keys, values)
    assert out.shape == (B, L, d_model)
    assert attn.shape == (B, n_heads, L, S)
    # bf16 weights / bf16 q,k,v / bf16 exp / bf16 attn storage -> loosened tolerance.
    assert jnp.allclose(out, ref_out, atol=5e-2, rtol=5e-2)
    assert jnp.allclose(attn.astype(jnp.float32), ref_attn, atol=3e-2, rtol=5e-2)

    # ---- Test 2: self-attention -> fused QKV + flash (KV-tiled) path, no attn out ----
    B2, L2 = 2, 32
    x = jax.random.normal(kx, (B2, L2, d_model), jnp.float32)
    out2, attn2 = attention_layer_forward(kparams, x, x, x, attn_mask=None,
                                          output_attention=False, kv_block=16)
    jax.block_until_ready(out2)

    ref_out2, _ = reference_forward(params, x, x, x)
    assert attn2 is None
    assert out2.shape == (B2, L2, d_model)
    assert jnp.allclose(out2, ref_out2, atol=5e-2, rtol=5e-2)

    print("KERNEL_OK")
</pallas_src>

<mosaic_0001>
module attributes {stable_mosaic.version = 11 : i64} {
  func.func @_linear_kernel(%arg0: i32, %arg1: i32, %arg2: i32, %arg3: memref<16x32xf32, #tpu.memory_space<vmem>>, %arg4: memref<32x32xbf16, #tpu.memory_space<vmem>>, %arg5: memref<1x32xbf16, #tpu.memory_space<vmem>>, %arg6: memref<16x32xbf16, #tpu.memory_space<vmem>>, %arg7: memref<16x32xf32, #tpu.memory_space<vmem>>) attributes {dimension_semantics = [#tpu.dimension_semantics<parallel>, #tpu.dimension_semantics<parallel>, #tpu.dimension_semantics<arbitrary>], iteration_bounds = array<i64: 1, 1, 1>, scalar_prefetch = 0 : i64, scratch_operands = 1 : i64, tpu.core_type = #tpu.core_type<tc>, window_params = [{transform_indices = @transform_0, window_bounds = array<i64: 16, 32>}, {transform_indices = @transform_1, window_bounds = array<i64: 32, 32>}, {transform_indices = @transform_2, window_bounds = array<i64: 1, 32>}, {transform_indices = @transform_3, window_bounds = array<i64: 16, 32>}]} {
    %c0_i32 = arith.constant 0 : i32
    %0 = arith.cmpi eq, %arg2, %c0_i32 : i32
    %1 = arith.extui %0 : i1 to i32
    %c0_i32_0 = arith.constant 0 : i32
    %2 = arith.cmpi ne, %1, %c0_i32_0 : i32
    scf.if %2 {
      %cst_10 = arith.constant 0.000000e+00 : f32
      %13 = vector.broadcast %cst_10 : f32 to vector<16x32xf32>
      %c0_11 = arith.constant 0 : index
      %c0_12 = arith.constant 0 : index
      %14 = vector.load %arg7[%c0_11, %c0_12] : memref<16x32xf32, #tpu.memory_space<vmem>>, vector<16x32xf32>
      tpu.vector_store %arg7[%c0_11, %c0_12], %13 {strides = array<i32>} : memref<16x32xf32, #tpu.memory_space<vmem>>, vector<16x32xf32>,
    } else {
    }
    %c0 = arith.constant 0 : index
    %c0_1 = arith.constant 0 : index
    %3 = vector.load %arg3[%c0, %c0_1] : memref<16x32xf32, #tpu.memory_space<vmem>>, vector<16x32xf32>
    %4 = arith.truncf %3 : vector<16x32xf32> to vector<16x32xbf16>
    %c0_2 = arith.constant 0 : index
    %c0_3 = arith.constant 0 : index
    %5 = vector.load %arg4[%c0_2, %c0_3] : memref<32x32xbf16, #tpu.memory_space<vmem>>, vector<32x32xbf16>
    %c0_4 = arith.constant 0 : index
    %c0_5 = arith.constant 0 : index
    %6 = vector.load %arg7[%c0_4, %c0_5] : memref<16x32xf32, #tpu.memory_space<vmem>>, vector<16x32xf32>
    %cst = arith.constant dense<0.000000e+00> : vector<16x32xf32>
    %7 = tpu.matmul %4, %5, %cst {dimension_numbers = #tpu.dot_dimension_numbers<[1], [0], [0], [1], [0, 0, 1, 1], [], []>} : vector<16x32xbf16>, vector<32x32xbf16>, vector<16x32xf32> -> vector<16x32xf32>
    %8 = arith.addf %6, %7 : vector<16x32xf32>
    %c0_6 = arith.constant 0 : index
    %c0_7 = arith.constant 0 : index
    %9 = vector.load %arg7[%c0_6, %c0_7] : memref<16x32xf32, #tpu.memory_space<vmem>>, vector<16x32xf32>
    tpu.vector_store %arg7[%c0_6, %c0_7], %8 {strides = array<i32>} : memref<16x32xf32, #tpu.memory_space<vmem>>, vector<16x32xf32>,
    %c0_i32_8 = arith.constant 0 : i32
    %10 = arith.cmpi eq, %arg2, %c0_i32_8 : i32
    %11 = arith.extui %10 : i1 to i32
    %c0_i32_9 = arith.constant 0 : i32
    %12 = arith.cmpi ne, %11, %c0_i32_9 : i32
    scf.if %12 {
      %c0_10 = arith.constant 0 : index
      %c0_11 = arith.constant 0 : index
      %13 = vector.load %arg7[%c0_10, %c0_11] : memref<16x32xf32, #tpu.memory_space<vmem>>, vector<16x32xf32>
      %c0_12 = arith.constant 0 : index
      %c0_13 = arith.constant 0 : index
      %14 = vector.load %arg5[%c0_12, %c0_13] : memref<1x32xbf16, #tpu.memory_space<vmem>>, vector<1x32xbf16>
      %15 = arith.extf %14 : vector<1x32xbf16> to vector<1x32xf32>
      %16 = vector.broadcast %15 : vector<1x32xf32> to vector<16x32xf32>
      %17 = arith.addf %13, %16 : vector<16x32xf32>
      %18 = arith.truncf %17 : vector<16x32xf32> to vector<16x32xbf16>
      %c0_14 = arith.constant 0 : index
      %c0_15 = arith.constant 0 : index
      %19 = vector.load %arg6[%c0_14, %c0_15] : memref<16x32xbf16, #tpu.memory_space<vmem>>, vector<16x32xbf16>
      tpu.vector_store %arg6[%c0_14, %c0_15], %18 {strides = array<i32>} : memref<16x32xbf16, #tpu.memory_space<vmem>>, vector<16x32xbf16>,
    } else {
    }
    return
  }
  func.func @transform_0(%arg0: i32, %arg1: i32, %arg2: i32) -> (i32, i32) {
    %c0_i32 = arith.constant 0 : i32
    return %arg0, %arg2 : i32, i32
  }
  func.func @transform_1(%arg0: i32, %arg1: i32, %arg2: i32) -> (i32, i32) {
    %c0_i32 = arith.constant 0 : i32
    return %arg2, %arg1 : i32, i32
  }
  func.func @transform_2(%arg0: i32, %arg1: i32, %arg2: i32) -> (i32, i32) {
    %c0_i32 = arith.constant 0 : i32
    %c0_i32_0 = arith.constant 0 : i32
    return %c0_i32, %arg1 : i32, i32
  }
  func.func @transform_3(%arg0: i32, %arg1: i32, %arg2: i32) -> (i32, i32) {
    %c0_i32 = arith.constant 0 : i32
    return %arg0, %arg1 : i32, i32
  }
}

</mosaic_0001>

<llo_original>
// kernel: tpu_custom_call.1
$region0: #{tpu_custom_call.1}
  #allocation0 [shape = 'u32[]', space=smem, size = 0x4, offset = 0x4, fixed_abs, tag = 'smem constant byte address 0x4 - core index']
  #allocation1 [shape = 'u32[144,128]{1,0:T(1,128)}', space=vmem, size = 0x12000, scoped, tag = 'internal scratch']
  #allocation2 [shape = 'f32[16,32]{1,0:T(8,128)}', space=vmem, size = 0x2000, scoped, tag = 'scratch operand']
  %s0 = inlined_call_operand.hbm [shape: f32[16,32], index: 0, kind: input, shape index: {}]
  %s1 = inlined_call_operand.hbm [shape: bf16[32,32], index: 1, kind: input, shape index: {}]
  %s2 = inlined_call_operand.hbm [shape: bf16[1,32], index: 2, kind: input, shape index: {}]
  %s3 = inlined_call_operand.hbm [shape: bf16[16,32], index: 3, kind: output, shape index: {}]
  %s4 = sld [smem:[#allocation0]]
  $region42: #{tpu_custom_call.1} parent=0
    _
  %s6 = ssub.s32 1, %s4
  %s7 = scalar_select 0, %s6, %s4
  $region1: #{tpu_custom_call.1} parent=0
    #allocation3 [shape = 'u8[8192]{0}', space=vmem, size = 0x2000, scoped, tag = 'input window, operand 0, single buffered']
    #allocation4 [shape = 's32[1]{0}', space=sflag, size = 0x4, scoped, tag = 'scoped memory for tpu_custom_call.1']
    #allocation5 [shape = 's32[1]{0}', space=sflag, size = 0x4, scoped, tag = 'scoped memory for tpu_custom_call.1']
    #allocation6 [shape = 'u8[8192]{0}', space=vmem, size = 0x2000, scoped, tag = 'input window, operand 1, single buffered']
    #allocation7 [shape = 's32[1]{0}', space=sflag, size = 0x4, scoped, tag = 'scoped memory for tpu_custom_call.1']
    #allocation8 [shape = 'u8[512]{0}', space=vmem, size = 0x400, scoped, tag = 'input window, operand 2, single buffered']
    #allocation9 [shape = 'u8[4096]{0}', space=vmem, size = 0x1000, scoped, tag = 'output window, operand 0, single buffered']
    %8 = vsyncpa [#allocation4], 0
    %9 = vsyncpa [#allocation7], 0
    %10 = vsyncpa [#allocation5], 0
    // Predicated region
    $region2: #{tpu_custom_call.1} parent=1 // pred_check
      _
    $region3: #{tpu_custom_call.1} parent=1 // pred_check_branch
      %12 = sbr.rel (0) target = $region5
    $region4: #{tpu_custom_call.1} parent=1 // pred_region
      %s14 = ssub.s32 256, 256
      %15 = vsyncadd [#allocation4], %s14
      %s16 = sshll.u32 [#allocation3], 4
      %s17 = int_to_ptr.vmem [resolvable:$true] %s16
      %22 = dma.hbm_to_vmem [thread:$0]  %s0, 256, %s17, [#allocation4], 128, 128, 8
    $region5: #{tpu_custom_call.1} parent=1 // pred_fallthru
      _
    // Predicated region
    $region6: #{tpu_custom_call.1} parent=1 // pred_check
      _
    $region7: #{tpu_custom_call.1} parent=1 // pred_check_branch
      %24 = sbr.rel (0) target = $region9
    $region8: #{tpu_custom_call.1} parent=1 // pred_region
      %s26 = ssub.s32 256, 256
      %27 = vsyncadd [#allocation7], %s26
      %s28 = sshll.u32 [#allocation6], 4
      %s29 = int_to_ptr.vmem [resolvable:$true] %s28
      %34 = dma.hbm_to_vmem [thread:$0]  %s1, 256, %s29, [#allocation7], 64, 64, 4
    $region9: #{tpu_custom_call.1} parent=1 // pred_fallthru
      _
    // Predicated region
    $region10: #{tpu_custom_call.1} parent=1 // pred_check
      _
    $region11: #{tpu_custom_call.1} parent=1 // pred_check_branch
      %36 = sbr.rel (0) target = $region13
    $region12: #{tpu_custom_call.1} parent=1 // pred_region
      %s38 = ssub.s32 16, 16
      %39 = vsyncadd [#allocation7], %s38
      %s41 = sshll.u32 [#allocation8], 4
      %s42 = int_to_ptr.vmem [resolvable:$true] %s41
      %44 = dma.hbm_to_vmem [thread:$0]  %s2, 16, %s42, [#allocation7]
    $region13: #{tpu_custom_call.1} parent=1 // pred_fallthru
      _
    // Predicated region
    $region14: #{tpu_custom_call.1} parent=1 // pred_check
      _
    $region15: #{tpu_custom_call.1} parent=1 // pred_check_branch
      %46 = sbr.rel (0) target = $region17
    $region16: #{tpu_custom_call.1} parent=1 // pred_region
      %47 = dma.done [#allocation4], 256
    $region17: #{tpu_custom_call.1} parent=1 // pred_fallthru
      _
    // Predicated region
    $region18: #{tpu_custom_call.1} parent=1 // pred_check
      _
    $region19: #{tpu_custom_call.1} parent=1 // pred_check_branch
      %49 = sbr.rel (0) target = $region21
    $region20: #{tpu_custom_call.1} parent=1 // pred_region
      %50 = dma.done [#allocation7], 256
    $region21: #{tpu_custom_call.1} parent=1 // pred_fallthru
      _
    // Predicated region
    $region22: #{tpu_custom_call.1} parent=1 // pred_check
      _
    $region23: #{tpu_custom_call.1} parent=1 // pred_check_branch
      %52 = sbr.rel (0) target = $region25
    $region24: #{tpu_custom_call.1} parent=1 // pred_region
      %53 = dma.done [#allocation7], 16
    $region25: #{tpu_custom_call.1} parent=1 // pred_fallthru
      _
    %p55 = scmp.eq.s32.totalorder 0, 0
    // Predicated region
    $region26: #{tpu_custom_call.1} parent=1 // pred_check
      %p56 = pneg %p55
    $region27: #{tpu_custom_call.1} parent=1 // pred_check_branch
      %58 = sbr.rel (%p56) target = $region29
    $region28: #{tpu_custom_call.1} parent=1 // pred_region
      %vm59 = vcmask 261120
      %60 = vst.msk [vmem:[#allocation2] sm:$0xff] %vm59, 0.0
      %61 = vst.msk [vmem:[#allocation2 + $0x8] sm:$0xff] %vm59, 0.0
    $region29: #{tpu_custom_call.1} parent=1 // pred_fallthru
      _
    %v62 = vld [vmem:[#allocation3] sm:$0xff]
    %v63 = vld [vmem:[#allocation3 + $0x8] sm:$0xff]
    %v64 = vpack.c.bf16 %v63, %v62
    %v65 = vld [vmem:[#allocation6] sm:$0xf]
    %v66 = vld [vmem:[#allocation6 + $0x4] sm:$0xf]
    %v67 = vld [vmem:[#allocation6 + $0x8] sm:$0xf]
    %v68 = vld [vmem:[#allocation6 + $0xc] sm:$0xf]
    %v69 = vld [vmem:[#allocation2] sm:$0xff]
    %v70 = vld [vmem:[#allocation2 + $0x8] sm:$0xff]
    %v75 = vunpack.c.l.b16 %v65
    %v76 = vunpack.c.l.b16 %v66
    %v77 = vunpack.c.l.b16 %v67
    %v78 = vunpack.c.l.b16 %v68
    %v79 = vpack.c.b16 %v76, %v75
    %v80 = vpack.c.b16 %v78, %v77
    %vm83 = vcmask 261120
    %v85 = vsel %vm83, %v64, 0
    %87 = vmatprep.subr.bf16.mxu0 0
    %88 = vmatpush1.bf16.msra.mxu0 %v79
    %89 = vmatprep.subr.bf16.mxu0 0
    %90 = vmatpush1.bf16.msra.mxu0 %v80
    %91 = vmatprep.subr.bf16.mxu0 0
    %92 = vmatpush1.bf16.msra.mxu0 0
    %93 = vmatprep.subr.bf16.mxu0 0
    %94 = vmatpush1.bf16.msra.mxu0 0
    %95 = vmatprep.subr.bf16.mxu0 0
    %96 = vmatpush1.bf16.msra.mxu0 0
    %97 = vmatprep.subr.bf16.mxu0 0
    %98 = vmatpush1.bf16.msra.mxu0 0
    %99 = vmatprep.subr.bf16.mxu0 0
    %100 = vmatpush1.bf16.msra.mxu0 0
    %101 = vmatprep.subr.bf16.mxu0 0
    %102 = vmatpush1.bf16.msra.mxu0 0
    %103 = vmatprep.subr.bf16.mxu0 0
    %104 = vmatpush1.bf16.msra.mxu0 0
    %105 = vmatprep.subr.bf16.mxu0 0
    %106 = vmatpush1.bf16.msra.mxu0 0
    %107 = vmatprep.subr.bf16.mxu0 0
    %108 = vmatpush1.bf16.msra.mxu0 0
    %109 = vmatprep.subr.bf16.mxu0 0
    %110 = vmatpush1.bf16.msra.mxu0 0
    %111 = vmatprep.subr.bf16.mxu0 0
    %112 = vmatpush1.bf16.msra.mxu0 0
    %113 = vmatprep.subr.bf16.mxu0 0
    %114 = vmatpush1.bf16.msra.mxu0 0
    %115 = vmatprep.subr.bf16.mxu0 0
    %116 = vmatpush1.bf16.msra.mxu0 0
    %117 = vmatprep.subr.bf16.mxu0 0
    %118 = vmatpush1.bf16.msra.mxu0 0
    %119 = vmatprep.mubr.bf16.mxu0 0
    %120 = vmatmul.mubr.bf16.gmra.mrb[0].mxu0 %v85
    %v121 = vpop.f32.mrb[0].mxu0
    %v122 = vadd.f32 0.0, %v121
    %v123 = vpop.f32.mrb[0].mxu0
    %v124 = vpop.f32.mrb[0].mxu0
    %v125 = vadd.f32 0.0, %v124
    %v126 = vpop.f32.mrb[0].mxu0
    %127 = vdwg.mxu0
    %v128 = vadd.f32 %v69, %v122
    %v129 = vadd.f32 %v70, %v125
    %130 = vst.msk [vmem:[#allocation2] sm:$0xff] %vm83, %v128
    %131 = vst.msk [vmem:[#allocation2 + $0x8] sm:$0xff] %vm83, %v129
    // Predicated region
    $region30: #{tpu_custom_call.1} parent=1 // pred_check
      %p132 = pneg %p55
    $region31: #{tpu_custom_call.1} parent=1 // pred_check_branch
      %134 = sbr.rel (%p132) target = $region33
    $region32: #{tpu_custom_call.1} parent=1 // pred_region
      %v135 = vld [vmem:[#allocation2] sm:$0xff]
      %v136 = vld [vmem:[#allocation2 + $0x8] sm:$0xff]
      %v137 = vld [vmem:[#allocation8] sm:$0x1]
      %v138 = vunpack.c.l.bf16 %v137
      %v139 = vlaneseq
      %v140 = vshrl.u32 %v139, 7
      %v141 = vsub.s32 0, %v140
      %v142 = vrot.slane %v138, %v141
      %v143 = vadd.f32 %v135, %v142
      %v144 = vadd.f32 %v136, %v142
      %v145 = vpack.c.bf16 %v144, %v143
      %v147 = vunpack.c.l.b16 %v145
      %v148 = vunpack.c.h.b16 %v145
      %v149 = vpack.c.b16 %v147, %v147
      %v150 = vpack.c.b16 %v148, %v148
      %vm153 = vcmask 257024
      %154 = vst.msk [vmem:[#allocation9] sm:$0xf] %vm153, %v149
      %155 = vst.msk [vmem:[#allocation9 + $0x4] sm:$0xf] %vm153, %v150
    $region33: #{tpu_custom_call.1} parent=1 // pred_fallthru
      _
    // Predicated region
    $region34: #{tpu_custom_call.1} parent=1 // pred_check
      _
    $region35: #{tpu_custom_call.1} parent=1 // pred_check_branch
      %157 = sbr.rel (0) target = $region37
    $region36: #{tpu_custom_call.1} parent=1 // pred_region
      %s159 = ssub.s32 128, 128
      %160 = vsyncadd [#allocation5], %s159
      %s161 = sshll.u32 [#allocation9], 4
      %s162 = int_to_ptr.vmem [resolvable:$true] %s161
      %167 = dma.vmem_to_hbm [thread:$0]  %s162, 128, %s3, [#allocation5], 64, 64, 4
    $region37: #{tpu_custom_call.1} parent=1 // pred_fallthru
      _
    // Predicated region
    $region38: #{tpu_custom_call.1} parent=1 // pred_check
      _
    $region39: #{tpu_custom_call.1} parent=1 // pred_check_branch
      %169 = sbr.rel (0) target = $region41
    $region40: #{tpu_custom_call.1} parent=1 // pred_region
      %170 = dma.done [#allocation5], 128
    $region41: #{tpu_custom_call.1} parent=1 // pred_fallthru
      _
    %171 = vsyncpa [#allocation4], 1
    %172 = vsyncpa [#allocation7], 1
    %173 = vsyncpa [#allocation5], 1

</llo_original>
